<compile_context>
chip_gen: v5e
topology: v5e:2x2
jax: 0.10.0
libtpu: 0.0.40
codegen_flags: <defaults>
</compile_context>

<pallas_src>
import functools

import jax
import jax.numpy as jnp
from jax.experimental import pallas as pl
from jax.experimental.pallas import tpu as pltpu

NUM_MODES = 6
HIDDEN = 256
LANE = 128


def _mode_block_width(embed_dim, future_steps):
    """Per-mode output column block width (multiple of 128 lanes)."""
    need = embed_dim + future_steps * 2 + 1          # h | loc | pi
    return LANE * pl.cdiv(need, LANE)


def _decoder_kernel(x_ref, wp_ref, bp_ref, w1_ref, b1_ref, w2_ref, b2_ref,
                    w3_ref, b3_ref, out_ref, hst_ref, *, batch, embed_dim, block):
    B, D, M = batch, embed_dim, NUM_MODES

    # 1) Projection for all 6 modes in one MXU matmul: (B, D) @ (D, 6D) -> (B, 6D).
    h6 = (jnp.dot(x_ref[...], wp_ref[...], preferred_element_type=jnp.float32)
          + bp_ref[...])

    # 2) Relayout (B, 6D) -> (6B, D), mode-major rows (row = m*B + b), via a small
    #    VMEM scratch.  Each mode's h also goes straight into its output column
    #    block (this is the x_modal part of the output).
    for m in range(M):
        hm = h6[:, m * D:(m + 1) * D]                      # (B, D) static lane slice
        hst_ref[m * B:(m + 1) * B, :] = hm
        out_ref[:, m * block:m * block + D] = hm
    h = hst_ref[...]                                       # (6B, D)

    # 3) Fused loc||pi layer 1: (6B, D) @ (D, 512), ReLU.
    a = jnp.dot(h, w1_ref[...], preferred_element_type=jnp.float32) + b1_ref[...]
    a = jnp.maximum(a, 0.0)
    # 4) Block-diagonal fused layer 2: (6B, 512) @ (512, 2D), ReLU (branches independent).
    a = jnp.dot(a, w2_ref[...], preferred_element_type=jnp.float32) + b2_ref[...]
    a = jnp.maximum(a, 0.0)
    # 5) Block-diagonal fused + lane-padded layer 3: (6B, 2D) @ (2D, block-D).
    #    Columns: [0:F2]=loc, [F2]=pi, rest pre-padded zeros.
    head = jnp.dot(a, w3_ref[...], preferred_element_type=jnp.float32) + b3_ref[...]

    # 6) Scatter each mode's head rows into the remaining columns of its block.
    for m in range(M):
        out_ref[:, m * block + D:(m + 1) * block] = head[m * B:(m + 1) * B, :]


def pack_decoder_params(params, *, embed_dim, future_steps, return_prob=True):
    """One-time packing of module weights into kernel layout (hoisted off the call path)."""
    D, F2, H = embed_dim, future_steps * 2, HIDDEN
    block = _mode_block_width(embed_dim, future_steps)
    headw = block - D
    f32 = jnp.float32

    wp = params["proj_w"].astype(f32)                                   # (D, 6D)
    bp = params["proj_b"].astype(f32).reshape(1, NUM_MODES * D)

    if return_prob:
        pw1, pb1 = params["pi_w1"], params["pi_b1"]
        pw2, pb2 = params["pi_w2"], params["pi_b2"]
        pw3, pb3 = params["pi_w3"], params["pi_b3"]
    else:
        pw1, pb1 = jnp.zeros((D, H), f32), jnp.zeros((H,), f32)
        pw2, pb2 = jnp.zeros((H, D), f32), jnp.zeros((D,), f32)
        pw3, pb3 = jnp.zeros((D, 1), f32), jnp.zeros((1,), f32)

    w1 = jnp.concatenate([params["loc_w1"], pw1], axis=1).astype(f32)   # (D, 512)
    b1 = jnp.concatenate([params["loc_b1"], pb1]).astype(f32).reshape(1, 2 * H)
    w2 = jnp.zeros((2 * H, 2 * D), f32)
    w2 = w2.at[:H, :D].set(params["loc_w2"]).at[H:, D:].set(pw2)        # (512, 2D)
    b2 = jnp.concatenate([params["loc_b2"], pb2]).astype(f32).reshape(1, 2 * D)
    w3 = jnp.zeros((2 * D, headw), f32)
    w3 = w3.at[:D, :F2].set(params["loc_w3"]).at[D:, F2:F2 + 1].set(pw3)  # (2D, 96)
    b3 = jnp.zeros((1, headw), f32)
    b3 = b3.at[0, :F2].set(params["loc_b3"]).at[0, F2].set(pb3[0])

    return dict(wp=wp, bp=bp, w1=w1, b1=b1, w2=w2, b2=b2, w3=w3, b3=b3)


@functools.partial(jax.jit, static_argnames=("embed_dim", "future_steps", "return_prob"))
def multimodal_decoder(x, packed, *, embed_dim, future_steps, return_prob=True):
    """x: (B, D) f32 -> (loc (B,6,F,2), pi (B,6) or None, x_modal (B,6,D))."""
    B, D = x.shape
    assert D == embed_dim
    M, F2 = NUM_MODES, future_steps * 2
    block = _mode_block_width(embed_dim, future_steps)
    R = B * M
    f32 = jnp.float32

    operands = (x.astype(f32), packed["wp"], packed["bp"], packed["w1"], packed["b1"],
                packed["w2"], packed["b2"], packed["w3"], packed["b3"])

    vmem_spec = pl.BlockSpec(memory_space=pltpu.MemorySpace.VMEM)
    flops = 2 * (B * D * M * D                     # projection
                 + R * D * 2 * HIDDEN              # head layer 1
                 + R * 2 * HIDDEN * 2 * D          # head layer 2
                 + R * 2 * D * (block - D))        # head layer 3 (padded)
    bytes_accessed = (sum(int(o.size) * o.dtype.itemsize for o in operands)
                      + B * M * block * 4)

    kernel = functools.partial(_decoder_kernel, batch=B, embed_dim=D, block=block)
    out = pl.pallas_call(
        kernel,
        out_shape=jax.ShapeDtypeStruct((B, M * block), f32),
        in_specs=[vmem_spec] * len(operands),
        out_specs=vmem_spec,
        scratch_shapes=[pltpu.VMEM((R, D), f32)],
        cost_estimate=pl.CostEstimate(flops=flops, transcendentals=0,
                                      bytes_accessed=bytes_accessed),
    )(*operands)

    # Back to PyTorch layouts: free reshape + slices only (row-major bitcast).
    out3 = out.reshape(B, M, block)
    x_modal = out3[..., :D]
    loc = out3[..., D:D + F2].reshape(B, M, future_steps, 2)
    pi = out3[..., D + F2] if return_prob else None
    return loc, pi, x_modal


def _init_params(key, embed_dim, future_steps):
    D, F2 = embed_dim, future_steps * 2
    shapes = {
        "proj_w": (D, 6 * D), "proj_b": (6 * D,),
        "loc_w1": (D, 256), "loc_b1": (256,),
        "loc_w2": (256, D), "loc_b2": (D,),
        "loc_w3": (D, F2), "loc_b3": (F2,),
        "pi_w1": (D, 256), "pi_b1": (256,),
        "pi_w2": (256, D), "pi_b2": (D,),
        "pi_w3": (D, 1), "pi_b3": (1,),
    }
    params = {}
    keys = jax.random.split(key, len(shapes))
    for k, (name, shp) in zip(keys, sorted(shapes.items())):
        params[name] = 0.05 * jax.random.normal(k, shp, dtype=jnp.float32)
    return params


def _reference(x, params, embed_dim, future_steps):
    # Pure-JAX reference mirroring the PyTorch module.
    B, D = x.shape
    h = x @ params["proj_w"] + params["proj_b"]                   # (B, 6D)
    h = h.reshape(B * 6, D)
    a = jnp.maximum(h @ params["loc_w1"] + params["loc_b1"], 0.0)
    a = jnp.maximum(a @ params["loc_w2"] + params["loc_b2"], 0.0)
    loc = (a @ params["loc_w3"] + params["loc_b3"]).reshape(B, 6, future_steps, 2)
    p = jnp.maximum(h @ params["pi_w1"] + params["pi_b1"], 0.0)
    p = jnp.maximum(p @ params["pi_w2"] + params["pi_b2"], 0.0)
    pi = (p @ params["pi_w3"] + params["pi_b3"]).reshape(B, 6)
    return loc, pi, h.reshape(B, 6, D)


if __name__ == "__main__":
    EMBED_DIM = 32
    FUTURE_STEPS = 8
    BATCH = 2

    key = jax.random.PRNGKey(0)
    k_x, k_p = jax.random.split(key)
    x = jax.random.normal(k_x, (BATCH, EMBED_DIM), dtype=jnp.float32)
    params = _init_params(k_p, EMBED_DIM, FUTURE_STEPS)

    # Weight packing happens ONCE, outside the per-call path.
    packed = jax.tree_util.tree_map(
        jax.block_until_ready,
        pack_decoder_params(params, embed_dim=EMBED_DIM, future_steps=FUTURE_STEPS,
                            return_prob=True))

    loc, pi, x_modal = multimodal_decoder(
        x, packed, embed_dim=EMBED_DIM, future_steps=FUTURE_STEPS, return_prob=True)
    jax.block_until_ready((loc, pi, x_modal))

    loc_r, pi_r, x_r = _reference(x, params, EMBED_DIM, FUTURE_STEPS)
    assert loc.shape == (BATCH, 6, FUTURE_STEPS, 2)
    assert pi.shape == (BATCH, 6)
    assert x_modal.shape == (BATCH, 6, EMBED_DIM)
    assert jnp.allclose(loc, loc_r, atol=1e-4)
    assert jnp.allclose(pi, pi_r, atol=1e-4)
    assert jnp.allclose(x_modal, x_r, atol=1e-4)

    print("KERNEL_OK")
</pallas_src>

<mosaic_0001>
module attributes {stable_mosaic.version = 11 : i64} {
  func.func @_decoder_kernel(%arg0: memref<2x32xf32, #tpu.memory_space<vmem>>, %arg1: memref<32x192xf32, #tpu.memory_space<vmem>>, %arg2: memref<1x192xf32, #tpu.memory_space<vmem>>, %arg3: memref<32x512xf32, #tpu.memory_space<vmem>>, %arg4: memref<1x512xf32, #tpu.memory_space<vmem>>, %arg5: memref<512x64xf32, #tpu.memory_space<vmem>>, %arg6: memref<1x64xf32, #tpu.memory_space<vmem>>, %arg7: memref<64x96xf32, #tpu.memory_space<vmem>>, %arg8: memref<1x96xf32, #tpu.memory_space<vmem>>, %arg9: memref<2x768xf32, #tpu.memory_space<vmem>>, %arg10: memref<12x32xf32, #tpu.memory_space<vmem>>) attributes {dimension_semantics = [], scalar_prefetch = 0 : i64, scratch_operands = 1 : i64, tpu.core_type = #tpu.core_type<tc>} {
    %c0 = arith.constant 0 : index
    %c0_0 = arith.constant 0 : index
    %0 = vector.load %arg0[%c0, %c0_0] : memref<2x32xf32, #tpu.memory_space<vmem>>, vector<2x32xf32>
    %c0_1 = arith.constant 0 : index
    %c0_2 = arith.constant 0 : index
    %1 = vector.load %arg1[%c0_1, %c0_2] : memref<32x192xf32, #tpu.memory_space<vmem>>, vector<32x192xf32>
    %cst = arith.constant dense<0.000000e+00> : vector<2x192xf32>
    %2 = tpu.matmul %0, %1, %cst {dimension_numbers = #tpu.dot_dimension_numbers<[1], [0], [0], [1], [0, 0, 1, 1], [], []>} : vector<2x32xf32>, vector<32x192xf32>, vector<2x192xf32> -> vector<2x192xf32>
    %c0_3 = arith.constant 0 : index
    %c0_4 = arith.constant 0 : index
    %3 = vector.load %arg2[%c0_3, %c0_4] : memref<1x192xf32, #tpu.memory_space<vmem>>, vector<1x192xf32>
    %4 = vector.broadcast %3 : vector<1x192xf32> to vector<2x192xf32>
    %5 = arith.addf %2, %4 : vector<2x192xf32>
    %6 = vector.extract_strided_slice %5 {offsets = [0, 0], sizes = [2, 32], strides = [1, 1]} : vector<2x192xf32> to vector<2x32xf32>
    %c0_5 = arith.constant 0 : index
    %c0_6 = arith.constant 0 : index
    %7 = vector.load %arg10[%c0_5, %c0_6] : memref<12x32xf32, #tpu.memory_space<vmem>>, vector<2x32xf32>
    tpu.vector_store %arg10[%c0_5, %c0_6], %6 {strides = array<i32>} : memref<12x32xf32, #tpu.memory_space<vmem>>, vector<2x32xf32>,
    %c0_7 = arith.constant 0 : index
    %c0_8 = arith.constant 0 : index
    %8 = vector.load %arg9[%c0_7, %c0_8] : memref<2x768xf32, #tpu.memory_space<vmem>>, vector<2x32xf32>
    tpu.vector_store %arg9[%c0_7, %c0_8], %6 {strides = array<i32>} : memref<2x768xf32, #tpu.memory_space<vmem>>, vector<2x32xf32>,
    %9 = vector.extract_strided_slice %5 {offsets = [0, 32], sizes = [2, 32], strides = [1, 1]} : vector<2x192xf32> to vector<2x32xf32>
    %c2 = arith.constant 2 : index
    %c0_9 = arith.constant 0 : index
    %10 = vector.load %arg10[%c2, %c0_9] : memref<12x32xf32, #tpu.memory_space<vmem>>, vector<2x32xf32>
    tpu.vector_store %arg10[%c2, %c0_9], %9 {strides = array<i32>} : memref<12x32xf32, #tpu.memory_space<vmem>>, vector<2x32xf32>,
    %c0_10 = arith.constant 0 : index
    %c128 = arith.constant 128 : index
    %11 = vector.load %arg9[%c0_10, %c128] : memref<2x768xf32, #tpu.memory_space<vmem>>, vector<2x32xf32>
    tpu.vector_store %arg9[%c0_10, %c128], %9 {strides = array<i32>} : memref<2x768xf32, #tpu.memory_space<vmem>>, vector<2x32xf32>,
    %12 = vector.extract_strided_slice %5 {offsets = [0, 64], sizes = [2, 32], strides = [1, 1]} : vector<2x192xf32> to vector<2x32xf32>
    %c4 = arith.constant 4 : index
    %c0_11 = arith.constant 0 : index
    %13 = vector.load %arg10[%c4, %c0_11] : memref<12x32xf32, #tpu.memory_space<vmem>>, vector<2x32xf32>
    tpu.vector_store %arg10[%c4, %c0_11], %12 {strides = array<i32>} : memref<12x32xf32, #tpu.memory_space<vmem>>, vector<2x32xf32>,
    %c0_12 = arith.constant 0 : index
    %c256 = arith.constant 256 : index
    %14 = vector.load %arg9[%c0_12, %c256] : memref<2x768xf32, #tpu.memory_space<vmem>>, vector<2x32xf32>
    tpu.vector_store %arg9[%c0_12, %c256], %12 {strides = array<i32>} : memref<2x768xf32, #tpu.memory_space<vmem>>, vector<2x32xf32>,
    %15 = vector.extract_strided_slice %5 {offsets = [0, 96], sizes = [2, 32], strides = [1, 1]} : vector<2x192xf32> to vector<2x32xf32>
    %c6 = arith.constant 6 : index
    %c0_13 = arith.constant 0 : index
    %16 = vector.load %arg10[%c6, %c0_13] : memref<12x32xf32, #tpu.memory_space<vmem>>, vector<2x32xf32>
    tpu.vector_store %arg10[%c6, %c0_13], %15 {strides = array<i32>} : memref<12x32xf32, #tpu.memory_space<vmem>>, vector<2x32xf32>,
    %c0_14 = arith.constant 0 : index
    %c384 = arith.constant 384 : index
    %17 = vector.load %arg9[%c0_14, %c384] : memref<2x768xf32, #tpu.memory_space<vmem>>, vector<2x32xf32>
    tpu.vector_store %arg9[%c0_14, %c384], %15 {strides = array<i32>} : memref<2x768xf32, #tpu.memory_space<vmem>>, vector<2x32xf32>,
    %18 = vector.extract_strided_slice %5 {offsets = [0, 128], sizes = [2, 32], strides = [1, 1]} : vector<2x192xf32> to vector<2x32xf32>
    %c8 = arith.constant 8 : index
    %c0_15 = arith.constant 0 : index
    %19 = vector.load %arg10[%c8, %c0_15] : memref<12x32xf32, #tpu.memory_space<vmem>>, vector<2x32xf32>
    tpu.vector_store %arg10[%c8, %c0_15], %18 {strides = array<i32>} : memref<12x32xf32, #tpu.memory_space<vmem>>, vector<2x32xf32>,
    %c0_16 = arith.constant 0 : index
    %c512 = arith.constant 512 : index
    %20 = vector.load %arg9[%c0_16, %c512] : memref<2x768xf32, #tpu.memory_space<vmem>>, vector<2x32xf32>
    tpu.vector_store %arg9[%c0_16, %c512], %18 {strides = array<i32>} : memref<2x768xf32, #tpu.memory_space<vmem>>, vector<2x32xf32>,
    %21 = vector.extract_strided_slice %5 {offsets = [0, 160], sizes = [2, 32], strides = [1, 1]} : vector<2x192xf32> to vector<2x32xf32>
    %c10 = arith.constant 10 : index
    %c0_17 = arith.constant 0 : index
    %22 = vector.load %arg10[%c10, %c0_17] : memref<12x32xf32, #tpu.memory_space<vmem>>, vector<2x32xf32>
    tpu.vector_store %arg10[%c10, %c0_17], %21 {strides = array<i32>} : memref<12x32xf32, #tpu.memory_space<vmem>>, vector<2x32xf32>,
    %c0_18 = arith.constant 0 : index
    %c640 = arith.constant 640 : index
    %23 = vector.load %arg9[%c0_18, %c640] : memref<2x768xf32, #tpu.memory_space<vmem>>, vector<2x32xf32>
    tpu.vector_store %arg9[%c0_18, %c640], %21 {strides = array<i32>} : memref<2x768xf32, #tpu.memory_space<vmem>>, vector<2x32xf32>,
    %c0_19 = arith.constant 0 : index
    %c0_20 = arith.constant 0 : index
    %24 = vector.load %arg10[%c0_19, %c0_20] : memref<12x32xf32, #tpu.memory_space<vmem>>, vector<12x32xf32>
    %c0_21 = arith.constant 0 : index
    %c0_22 = arith.constant 0 : index
    %25 = vector.load %arg3[%c0_21, %c0_22] : memref<32x512xf32, #tpu.memory_space<vmem>>, vector<32x512xf32>
    %cst_23 = arith.constant dense<0.000000e+00> : vector<12x512xf32>
    %26 = tpu.matmul %24, %25, %cst_23 {dimension_numbers = #tpu.dot_dimension_numbers<[1], [0], [0], [1], [0, 0, 1, 1], [], []>} : vector<12x32xf32>, vector<32x512xf32>, vector<12x512xf32> -> vector<12x512xf32>
    %c0_24 = arith.constant 0 : index
    %c0_25 = arith.constant 0 : index
    %27 = vector.load %arg4[%c0_24, %c0_25] : memref<1x512xf32, #tpu.memory_space<vmem>>, vector<1x512xf32>
    %28 = vector.broadcast %27 : vector<1x512xf32> to vector<12x512xf32>
    %29 = arith.addf %26, %28 : vector<12x512xf32>
    %cst_26 = arith.constant 0.000000e+00 : f32
    %30 = vector.broadcast %cst_26 : f32 to vector<12x512xf32>
    %31 = arith.maximumf %29, %30 : vector<12x512xf32>
    %c0_27 = arith.constant 0 : index
    %c0_28 = arith.constant 0 : index
    %32 = vector.load %arg5[%c0_27, %c0_28] : memref<512x64xf32, #tpu.memory_space<vmem>>, vector<512x64xf32>
    %cst_29 = arith.constant dense<0.000000e+00> : vector<12x64xf32>
    %33 = tpu.matmul %31, %32, %cst_29 {dimension_numbers = #tpu.dot_dimension_numbers<[1], [0], [0], [1], [0, 0, 1, 1], [], []>} : vector<12x512xf32>, vector<512x64xf32>, vector<12x64xf32> -> vector<12x64xf32>
    %c0_30 = arith.constant 0 : index
    %c0_31 = arith.constant 0 : index
    %34 = vector.load %arg6[%c0_30, %c0_31] : memref<1x64xf32, #tpu.memory_space<vmem>>, vector<1x64xf32>
    %35 = vector.broadcast %34 : vector<1x64xf32> to vector<12x64xf32>
    %36 = arith.addf %33, %35 : vector<12x64xf32>
    %cst_32 = arith.constant 0.000000e+00 : f32
    %37 = vector.broadcast %cst_32 : f32 to vector<12x64xf32>
    %38 = arith.maximumf %36, %37 : vector<12x64xf32>
    %c0_33 = arith.constant 0 : index
    %c0_34 = arith.constant 0 : index
    %39 = vector.load %arg7[%c0_33, %c0_34] : memref<64x96xf32, #tpu.memory_space<vmem>>, vector<64x96xf32>
    %cst_35 = arith.constant dense<0.000000e+00> : vector<12x96xf32>
    %40 = tpu.matmul %38, %39, %cst_35 {dimension_numbers = #tpu.dot_dimension_numbers<[1], [0], [0], [1], [0, 0, 1, 1], [], []>} : vector<12x64xf32>, vector<64x96xf32>, vector<12x96xf32> -> vector<12x96xf32>
    %c0_36 = arith.constant 0 : index
    %c0_37 = arith.constant 0 : index
    %41 = vector.load %arg8[%c0_36, %c0_37] : memref<1x96xf32, #tpu.memory_space<vmem>>, vector<1x96xf32>
    %42 = vector.broadcast %41 : vector<1x96xf32> to vector<12x96xf32>
    %43 = arith.addf %40, %42 : vector<12x96xf32>
    %44 = vector.extract_strided_slice %43 {offsets = [0, 0], sizes = [2, 96], strides = [1, 1]} : vector<12x96xf32> to vector<2x96xf32>
    %c0_38 = arith.constant 0 : index
    %c32 = arith.constant 32 : index
    %45 = vector.load %arg9[%c0_38, %c32] : memref<2x768xf32, #tpu.memory_space<vmem>>, vector<2x96xf32>
    tpu.vector_store %arg9[%c0_38, %c32], %44 {strides = array<i32>} : memref<2x768xf32, #tpu.memory_space<vmem>>, vector<2x96xf32>,
    %46 = vector.extract_strided_slice %43 {offsets = [2, 0], sizes = [2, 96], strides = [1, 1]} : vector<12x96xf32> to vector<2x96xf32>
    %c0_39 = arith.constant 0 : index
    %c160 = arith.constant 160 : index
    %47 = vector.load %arg9[%c0_39, %c160] : memref<2x768xf32, #tpu.memory_space<vmem>>, vector<2x96xf32>
    tpu.vector_store %arg9[%c0_39, %c160], %46 {strides = array<i32>} : memref<2x768xf32, #tpu.memory_space<vmem>>, vector<2x96xf32>,
    %48 = vector.extract_strided_slice %43 {offsets = [4, 0], sizes = [2, 96], strides = [1, 1]} : vector<12x96xf32> to vector<2x96xf32>
    %c0_40 = arith.constant 0 : index
    %c288 = arith.constant 288 : index
    %49 = vector.load %arg9[%c0_40, %c288] : memref<2x768xf32, #tpu.memory_space<vmem>>, vector<2x96xf32>
    tpu.vector_store %arg9[%c0_40, %c288], %48 {strides = array<i32>} : memref<2x768xf32, #tpu.memory_space<vmem>>, vector<2x96xf32>,
    %50 = vector.extract_strided_slice %43 {offsets = [6, 0], sizes = [2, 96], strides = [1, 1]} : vector<12x96xf32> to vector<2x96xf32>
    %c0_41 = arith.constant 0 : index
    %c416 = arith.constant 416 : index
    %51 = vector.load %arg9[%c0_41, %c416] : memref<2x768xf32, #tpu.memory_space<vmem>>, vector<2x96xf32>
    tpu.vector_store %arg9[%c0_41, %c416], %50 {strides = array<i32>} : memref<2x768xf32, #tpu.memory_space<vmem>>, vector<2x96xf32>,
    %52 = vector.extract_strided_slice %43 {offsets = [8, 0], sizes = [2, 96], strides = [1, 1]} : vector<12x96xf32> to vector<2x96xf32>
    %c0_42 = arith.constant 0 : index
    %c544 = arith.constant 544 : index
    %53 = vector.load %arg9[%c0_42, %c544] : memref<2x768xf32, #tpu.memory_space<vmem>>, vector<2x96xf32>
    tpu.vector_store %arg9[%c0_42, %c544], %52 {strides = array<i32>} : memref<2x768xf32, #tpu.memory_space<vmem>>, vector<2x96xf32>,
    %54 = vector.extract_strided_slice %43 {offsets = [10, 0], sizes = [2, 96], strides = [1, 1]} : vector<12x96xf32> to vector<2x96xf32>
    %c0_43 = arith.constant 0 : index
    %c672 = arith.constant 672 : index
    %55 = vector.load %arg9[%c0_43, %c672] : memref<2x768xf32, #tpu.memory_space<vmem>>, vector<2x96xf32>
    tpu.vector_store %arg9[%c0_43, %c672], %54 {strides = array<i32>} : memref<2x768xf32, #tpu.memory_space<vmem>>, vector<2x96xf32>,
    return
  }
}

</mosaic_0001>

<llo_original>
// kernel: multimodal_decoder.1
$region0: #{multimodal_decoder.1}
  #allocation0 [shape = 'u32[]', space=smem, size = 0x4, offset = 0x4, fixed_abs, tag = 'smem constant byte address 0x4 - core index']
  #allocation1 [shape = 'u32[72,128]{1,0:T(1,128)}', space=vmem, size = 0x9000, scoped, tag = 'internal scratch']
  #allocation2 [shape = 'f32[12,32]{1,0:T(8,128)}', space=vmem, size = 0x2000, scoped, tag = 'scratch operand']
  %s0 = inlined_call_operand.vmem [shape: f32[2,32], index: 0, kind: input, shape index: {}]
  %s1 = inlined_call_operand.vmem [shape: f32[32,192], index: 1, kind: input, shape index: {}]
  %s2 = inlined_call_operand.vmem [shape: f32[1,192], index: 2, kind: input, shape index: {}]
  %s3 = inlined_call_operand.vmem [shape: f32[32,512], index: 3, kind: input, shape index: {}]
  %s4 = inlined_call_operand.vmem [shape: f32[1,512], index: 4, kind: input, shape index: {}]
  %s5 = inlined_call_operand.vmem [shape: f32[512,64], index: 5, kind: input, shape index: {}]
  %s6 = inlined_call_operand.vmem [shape: f32[1,64], index: 6, kind: input, shape index: {}]
  %s7 = inlined_call_operand.vmem [shape: f32[64,96], index: 7, kind: input, shape index: {}]
  %s8 = inlined_call_operand.vmem [shape: f32[1,96], index: 8, kind: input, shape index: {}]
  %s9 = inlined_call_operand.vmem [shape: f32[2,768], index: 9, kind: output, shape index: {}]
  %s10 = sld [smem:[#allocation0]]
  $region46: #{multimodal_decoder.1} parent=0
    _
  %s12 = ssub.s32 1, %s10
  %s13 = scalar_select 0, %s12, %s10
  // Predicated region
  $region2: #{multimodal_decoder.1} parent=0 // pred_check
    _
  $region3: #{multimodal_decoder.1} parent=0 // pred_check_branch
    %15 = sbr.rel (0) target = $region5
  $region4: #{multimodal_decoder.1} parent=0 // pred_region
    _
  $region5: #{multimodal_decoder.1} parent=0 // pred_fallthru
    _
  // Predicated region
  $region6: #{multimodal_decoder.1} parent=0 // pred_check
    _
  $region7: #{multimodal_decoder.1} parent=0 // pred_check_branch
    %17 = sbr.rel (0) target = $region9
  $region8: #{multimodal_decoder.1} parent=0 // pred_region
    _
  $region9: #{multimodal_decoder.1} parent=0 // pred_fallthru
    _
  // Predicated region
  $region10: #{multimodal_decoder.1} parent=0 // pred_check
    _
  $region11: #{multimodal_decoder.1} parent=0 // pred_check_branch
    %19 = sbr.rel (0) target = $region13
  $region12: #{multimodal_decoder.1} parent=0 // pred_region
    _
  $region13: #{multimodal_decoder.1} parent=0 // pred_fallthru
    _
  // Predicated region
  $region14: #{multimodal_decoder.1} parent=0 // pred_check
    _
  $region15: #{multimodal_decoder.1} parent=0 // pred_check_branch
    %21 = sbr.rel (0) target = $region17
  $region16: #{multimodal_decoder.1} parent=0 // pred_region
    _
  $region17: #{multimodal_decoder.1} parent=0 // pred_fallthru
    _
  // Predicated region
  $region18: #{multimodal_decoder.1} parent=0 // pred_check
    _
  $region19: #{multimodal_decoder.1} parent=0 // pred_check_branch
    %23 = sbr.rel (0) target = $region21
  $region20: #{multimodal_decoder.1} parent=0 // pred_region
    _
  $region21: #{multimodal_decoder.1} parent=0 // pred_fallthru
    _
  // Predicated region
  $region22: #{multimodal_decoder.1} parent=0 // pred_check
    _
  $region23: #{multimodal_decoder.1} parent=0 // pred_check_branch
    %25 = sbr.rel (0) target = $region25
  $region24: #{multimodal_decoder.1} parent=0 // pred_region
    _
  $region25: #{multimodal_decoder.1} parent=0 // pred_fallthru
    _
  // Predicated region
  $region26: #{multimodal_decoder.1} parent=0 // pred_check
    _
  $region27: #{multimodal_decoder.1} parent=0 // pred_check_branch
    %27 = sbr.rel (0) target = $region29
  $region28: #{multimodal_decoder.1} parent=0 // pred_region
    _
  $region29: #{multimodal_decoder.1} parent=0 // pred_fallthru
    _
  // Predicated region
  $region30: #{multimodal_decoder.1} parent=0 // pred_check
    _
  $region31: #{multimodal_decoder.1} parent=0 // pred_check_branch
    %29 = sbr.rel (0) target = $region33
  $region32: #{multimodal_decoder.1} parent=0 // pred_region
    _
  $region33: #{multimodal_decoder.1} parent=0 // pred_fallthru
    _
  // Predicated region
  $region34: #{multimodal_decoder.1} parent=0 // pred_check
    _
  $region35: #{multimodal_decoder.1} parent=0 // pred_check_branch
    %31 = sbr.rel (0) target = $region37
  $region36: #{multimodal_decoder.1} parent=0 // pred_region
    _
  $region37: #{multimodal_decoder.1} parent=0 // pred_fallthru
    _
  %v32 = vld [vmem:[%s0] sm:$0x3]
  %v33 = vld [vmem:[%s1] sm:$0xff]
  %v34 = vld [vmem:[%s1 + $0x8] sm:$0xff]
  %v35 = vld [vmem:[%s1 + $0x10] sm:$0xff]
  %v36 = vld [vmem:[%s1 + $0x18] sm:$0xff]
  %v37 = vld [vmem:[%s1 + $0x20] sm:$0xff]
  %v38 = vld [vmem:[%s1 + $0x28] sm:$0xff]
  %v39 = vld [vmem:[%s1 + $0x30] sm:$0xff]
  %v40 = vld [vmem:[%s1 + $0x38] sm:$0xff]
  %v41 = vld [vmem:[%s2] sm:$0x3]
  %v43 = vperm.slane %v41, 0
  %v44 = vperm.slane %v41, 1
  %vm47 = vcmask 261120
  %v49 = vsel %vm47, %v32, 0
  %51 = vmatpush.msra.mxu0 0.0
  %52 = vmatpush.msra.mxu0 0.0
  %53 = vmatpush.msra.mxu0 0.0
  %54 = vmatpush.msra.mxu0 0.0
  %55 = vmatpush.msra.mxu0 0.0
  %56 = vmatpush.msra.mxu0 0.0
  %57 = vmatpush.msra.mxu0 0.0
  %58 = vmatpush.msra.mxu0 0.0
  %59 = vmatpush.msra.mxu0 0.0
  %60 = vmatpush.msra.mxu0 0.0
  %61 = vmatpush.msra.mxu0 0.0
  %62 = vmatpush.msra.mxu0 0.0
  %63 = vmatpush.msra.mxu0 %v39
  %64 = vmatpush.msra.mxu0 %v37
  %65 = vmatpush.msra.mxu0 %v35
  %66 = vmatpush.msra.mxu0 %v33
  %67 = vmatmul.f32.gmra.mxu0 %v49
  %v68 = vpop.f32.mrf.mxu0
  %v69 = vadd.f32 %v43, %v68
  %70 = vdwg.mxu0
  %71 = vmatpush.msra.mxu0 0.0
  %72 = vmatpush.msra.mxu0 0.0
  %73 = vmatpush.msra.mxu0 0.0
  %74 = vmatpush.msra.mxu0 0.0
  %75 = vmatpush.msra.mxu0 0.0
  %76 = vmatpush.msra.mxu0 0.0
  %77 = vmatpush.msra.mxu0 0.0
  %78 = vmatpush.msra.mxu0 0.0
  %79 = vmatpush.msra.mxu0 0.0
  %80 = vmatpush.msra.mxu0 0.0
  %81 = vmatpush.msra.mxu0 0.0
  %82 = vmatpush.msra.mxu0 0.0
  %83 = vmatpush.msra.mxu0 %v40
  %84 = vmatpush.msra.mxu0 %v38
  %85 = vmatpush.msra.mxu0 %v36
  %86 = vmatpush.msra.mxu0 %v34
  %87 = vmatmul.f32.gmra.mxu0 %v49
  %v88 = vpop.f32.mrf.mxu0
  %v89 = vadd.f32 %v44, %v88
  %90 = vdwg.mxu0
  %vm91 = vcmask 254976
  %92 = vst.msk [vmem:[#allocation2] sm:$0x3] %vm91, %v69
  %93 = vst.msk [vmem:[%s9] sm:$0x3] %vm91, %v69
  %95 = vrot.lane.b32.xlu0 %v69, 96
  %v96 = vpop.permute.xlu0 %95
  %98 = vst.msk [vmem:[#allocation2 + $0x2] sm:$0x3] %vm91, %v96
  %99 = vst.msk [vmem:[%s9 + $0x2] sm:$0x3] %vm91, %v96
  %100 = vrot.lane.b32.xlu0 %v69, 64
  %v101 = vpop.permute.xlu0 %100
  %103 = vst.msk [vmem:[#allocation2 + $0x4] sm:$0x3] %vm91, %v101
  %104 = vst.msk [vmem:[%s9 + $0x4] sm:$0x3] %vm91, %v101
  %105 = vrot.lane.b32.xlu0 %v69, 32
  %v106 = vpop.permute.xlu0 %105
  %108 = vst.msk [vmem:[#allocation2 + $0x6] sm:$0x3] %vm91, %v106
  %109 = vst.msk [vmem:[%s9 + $0x6] sm:$0x3] %vm91, %v106
  %110 = vst.msk [vmem:[#allocation2 + $0x8] sm:$0x3] %vm91, %v89
  %111 = vst.msk [vmem:[%s9 + $0x8] sm:$0x3] %vm91, %v89
  %113 = vrot.lane.b32.xlu0 %v89, 96
  %v114 = vpop.permute.xlu0 %113
  %116 = vst.msk [vmem:[#allocation2 + $0xa] sm:$0x3] %vm91, %v114
  %117 = vst.msk [vmem:[%s9 + $0xa] sm:$0x3] %vm91, %v114
  %v118 = vld [vmem:[#allocation2] sm:$0xff]
  %v119 = vld [vmem:[#allocation2 + $0x8] sm:$0xf]
  %v120 = vld [vmem:[%s3] sm:$0xff]
  %v121 = vld [vmem:[%s3 + $0x8] sm:$0xff]
  %v122 = vld [vmem:[%s3 + $0x10] sm:$0xff]
  %v123 = vld [vmem:[%s3 + $0x18] sm:$0xff]
  %v124 = vld [vmem:[%s3 + $0x20] sm:$0xff]
  %v125 = vld [vmem:[%s3 + $0x28] sm:$0xff]
  %v126 = vld [vmem:[%s3 + $0x30] sm:$0xff]
  %v127 = vld [vmem:[%s3 + $0x38] sm:$0xff]
  %v128 = vld [vmem:[%s3 + $0x40] sm:$0xff]
  %v129 = vld [vmem:[%s3 + $0x48] sm:$0xff]
  %v130 = vld [vmem:[%s3 + $0x50] sm:$0xff]
  %v131 = vld [vmem:[%s3 + $0x58] sm:$0xff]
  %v132 = vld [vmem:[%s3 + $0x60] sm:$0xff]
  %v133 = vld [vmem:[%s3 + $0x68] sm:$0xff]
  %v134 = vld [vmem:[%s3 + $0x70] sm:$0xff]
  %v135 = vld [vmem:[%s3 + $0x78] sm:$0xff]
  %v136 = vld [vmem:[%s4] sm:$0xf]
  %v138 = vperm.slane %v136, 0
  %v139 = vperm.slane %v136, 1
  %v140 = vperm.slane %v136, 2
  %v141 = vperm.slane %v136, 3
  %v147 = vsel %vm47, %v118, 0
  %v150 = vsel %vm47, %v119, 0
  %152 = vmatpush.msra.mxu0 0.0
  %153 = vmatpush.msra.mxu0 0.0
  %154 = vmatpush.msra.mxu0 0.0
  %155 = vmatpush.msra.mxu0 0.0
  %156 = vmatpush.msra.mxu0 0.0
  %157 = vmatpush.msra.mxu0 0.0
  %158 = vmatpush.msra.mxu0 0.0
  %159 = vmatpush.msra.mxu0 0.0
  %160 = vmatpush.msra.mxu0 0.0
  %161 = vmatpush.msra.mxu0 0.0
  %162 = vmatpush.msra.mxu0 0.0
  %163 = vmatpush.msra.mxu0 0.0
  %164 = vmatpush.msra.mxu0 %v132
  %165 = vmatpush.msra.mxu0 %v128
  %166 = vmatpush.msra.mxu0 %v124
  %167 = vmatpush.msra.mxu0 %v120
  %168 = vmatmul.f32.gmra.mxu0 %v147
  %v169 = vpop.f32.mrf.mxu0
  %v170 = vadd.f32 %v138, %v169
  %171 = vmatmul.f32.gmra.mxu0 %v150
  %v172 = vpop.f32.mrf.mxu0
  %v173 = vadd.f32 %v138, %v172
  %174 = vdwg.mxu0
  %175 = vmatpush.msra.mxu0 0.0
  %176 = vmatpush.msra.mxu0 0.0
  %177 = vmatpush.msra.mxu0 0.0
  %178 = vmatpush.msra.mxu0 0.0
  %179 = vmatpush.msra.mxu0 0.0
  %180 = vmatpush.msra.mxu0 0.0
  %181 = vmatpush.msra.mxu0 0.0
  %182 = vmatpush.msra.mxu0 0.0
  %183 = vmatpush.msra.mxu0 0.0
  %184 = vmatpush.msra.mxu0 0.0
  %185 = vmatpush.msra.mxu0 0.0
  %186 = vmatpush.msra.mxu0 0.0
  %187 = vmatpush.msra.mxu0 %v133
  %188 = vmatpush.msra.mxu0 %v129
  %189 = vmatpush.msra.mxu0 %v125
  %190 = vmatpush.msra.mxu0 %v121
  %191 = vmatmul.f32.gmra.mxu0 %v147
  %v192 = vpop.f32.mrf.mxu0
  %v193 = vadd.f32 %v139, %v192
  %194 = vmatmul.f32.gmra.mxu0 %v150
  %v195 = vpop.f32.mrf.mxu0
  %v196 = vadd.f32 %v139, %v195
  %197 = vdwg.mxu0
  %198 = vmatpush.msra.mxu0 0.0
  %199 = vmatpush.msra.mxu0 0.0
  %200 = vmatpush.msra.mxu0 0.0
  %201 = vmatpush.msra.mxu0 0.0
  %202 = vmatpush.msra.mxu0 0.0
  %203 = vmatpush.msra.mxu0 0.0
  %204 = vmatpush.msra.mxu0 0.0
  %205 = vmatpush.msra.mxu0 0.0
  %206 = vmatpush.msra.mxu0 0.0
  %207 = vmatpush.msra.mxu0 0.0
  %208 = vmatpush.msra.mxu0 0.0
  %209 = vmatpush.msra.mxu0 0.0
  %210 = vmatpush.msra.mxu0 %v134
  %211 = vmatpush.msra.mxu0 %v130
  %212 = vmatpush.msra.mxu0 %v126
  %213 = vmatpush.msra.mxu0 %v122
  %214 = vmatmul.f32.gmra.mxu0 %v147
  %v215 = vpop.f32.mrf.mxu0
  %v216 = vadd.f32 %v140, %v215
  %217 = vmatmul.f32.gmra.mxu0 %v150
  %v218 = vpop.f32.mrf.mxu0
  %v219 = vadd.f32 %v140, %v218
  %220 = vdwg.mxu0
  %221 = vmatpush.msra.mxu0 0.0
  %222 = vmatpush.msra.mxu0 0.0
  %223 = vmatpush.msra.mxu0 0.0
  %224 = vmatpush.msra.mxu0 0.0
  %225 = vmatpush.msra.mxu0 0.0
  %226 = vmatpush.msra.mxu0 0.0
  %227 = vmatpush.msra.mxu0 0.0
  %228 = vmatpush.msra.mxu0 0.0
  %229 = vmatpush.msra.mxu0 0.0
  %230 = vmatpush.msra.mxu0 0.0
  %231 = vmatpush.msra.mxu0 0.0
  %232 = vmatpush.msra.mxu0 0.0
  %233 = vmatpush.msra.mxu0 %v135
  %234 = vmatpush.msra.mxu0 %v131
  %235 = vmatpush.msra.mxu0 %v127
  %236 = vmatpush.msra.mxu0 %v123
  %237 = vmatmul.f32.gmra.mxu0 %v147
  %v238 = vpop.f32.mrf.mxu0
  %v239 = vadd.f32 %v141, %v238
  %240 = vmatmul.f32.gmra.mxu0 %v150
  %v241 = vpop.f32.mrf.mxu0
  %v242 = vadd.f32 %v141, %v241
  %243 = vdwg.mxu0
  %v244 = vmax.f32 %v170, 0.0
  %v245 = vmax.f32 %v193, 0.0
  %v246 = vmax.f32 %v216, 0.0
  %v247 = vmax.f32 %v239, 0.0
  %v248 = vmax.f32 %v173, 0.0
  %v249 = vmax.f32 %v196, 0.0
  %v250 = vmax.f32 %v219, 0.0
  %v251 = vmax.f32 %v242, 0.0
  %v252 = vld [vmem:[%s5] sm:$0xff]
  %v253 = vld [vmem:[%s5 + $0x8] sm:$0xff]
  %v254 = vld [vmem:[%s5 + $0x10] sm:$0xff]
  %v255 = vld [vmem:[%s5 + $0x18] sm:$0xff]
  %v256 = vld [vmem:[%s5 + $0x20] sm:$0xff]
  %v257 = vld [vmem:[%s5 + $0x28] sm:$0xff]
  %v258 = vld [vmem:[%s5 + $0x30] sm:$0xff]
  %v259 = vld [vmem:[%s5 + $0x38] sm:$0xff]
  %v260 = vld [vmem:[%s5 + $0x40] sm:$0xff]
  %v261 = vld [vmem:[%s5 + $0x48] sm:$0xff]
  %v262 = vld [vmem:[%s5 + $0x50] sm:$0xff]
  %v263 = vld [vmem:[%s5 + $0x58] sm:$0xff]
  %v264 = vld [vmem:[%s5 + $0x60] sm:$0xff]
  %v265 = vld [vmem:[%s5 + $0x68] sm:$0xff]
  %v266 = vld [vmem:[%s5 + $0x70] sm:$0xff]
  %v267 = vld [vmem:[%s5 + $0x78] sm:$0xff]
  %v268 = vld [vmem:[%s5 + $0x80] sm:$0xff]
  %v269 = vld [vmem:[%s5 + $0x88] sm:$0xff]
  %v270 = vld [vmem:[%s5 + $0x90] sm:$0xff]
  %v271 = vld [vmem:[%s5 + $0x98] sm:$0xff]
  %v272 = vld [vmem:[%s5 + $0xa0] sm:$0xff]
  %v273 = vld [vmem:[%s5 + $0xa8] sm:$0xff]
  %v274 = vld [vmem:[%s5 + $0xb0] sm:$0xff]
  %v275 = vld [vmem:[%s5 + $0xb8] sm:$0xff]
  %v276 = vld [vmem:[%s5 + $0xc0] sm:$0xff]
  %v277 = vld [vmem:[%s5 + $0xc8] sm:$0xff]
  %v278 = vld [vmem:[%s5 + $0xd0] sm:$0xff]
  %v279 = vld [vmem:[%s5 + $0xd8] sm:$0xff]
  %v280 = vld [vmem:[%s5 + $0xe0] sm:$0xff]
  %v281 = vld [vmem:[%s5 + $0xe8] sm:$0xff]
  %v282 = vld [vmem:[%s5 + $0xf0] sm:$0xff]
  %v283 = vld [vmem:[%s5 + $0xf8] sm:$0xff]
  %v284 = vld [vmem:[%s5 + $0x100] sm:$0xff]
  %v285 = vld [vmem:[%s5 + $0x108] sm:$0xff]
  %v286 = vld [vmem:[%s5 + $0x110] sm:$0xff]
  %v287 = vld [vmem:[%s5 + $0x118] sm:$0xff]
  %v288 = vld [vmem:[%s5 + $0x120] sm:$0xff]
  %v289 = vld [vmem:[%s5 + $0x128] sm:$0xff]
  %v290 = vld [vmem:[%s5 + $0x130] sm:$0xff]
  %v291 = vld [vmem:[%s5 + $0x138] sm:$0xff]
  %v292 = vld [vmem:[%s5 + $0x140] sm:$0xff]
  %v293 = vld [vmem:[%s5 + $0x148] sm:$0xff]
  %v294 = vld [vmem:[%s5 + $0x150] sm:$0xff]
  %v295 = vld [vmem:[%s5 + $0x158] sm:$0xff]
  %v296 = vld [vmem:[%s5 + $0x160] sm:$0xff]
  %v297 = vld [vmem:[%s5 + $0x168] sm:$0xff]
  %v298 = vld [vmem:[%s5 + $0x170] sm:$0xff]
  %v299 = vld [vmem:[%s5 + $0x178] sm:$0xff]
  %v300 = vld [vmem:[%s5 + $0x180] sm:$0xff]
  %v301 = vld [vmem:[%s5 + $0x188] sm:$0xff]
  %v302 = vld [vmem:[%s5 + $0x190] sm:$0xff]
  %v303 = vld [vmem:[%s5 + $0x198] sm:$0xff]
  %v304 = vld [vmem:[%s5 + $0x1a0] sm:$0xff]
  %v305 = vld [vmem:[%s5 + $0x1a8] sm:$0xff]
  %v306 = vld [vmem:[%s5 + $0x1b0] sm:$0xff]
  %v307 = vld [vmem:[%s5 + $0x1b8] sm:$0xff]
  %v308 = vld [vmem:[%s5 + $0x1c0] sm:$0xff]
  %v309 = vld [vmem:[%s5 + $0x1c8] sm:$0xff]
  %v310 = vld [vmem:[%s5 + $0x1d0] sm:$0xff]
  %v311 = vld [vmem:[%s5 + $0x1d8] sm:$0xff]
  %v312 = vld [vmem:[%s5 + $0x1e0] sm:$0xff]
  %v313 = vld [vmem:[%s5 + $0x1e8] sm:$0xff]
  %v314 = vld [vmem:[%s5 + $0x1f0] sm:$0xff]
  %v315 = vld [vmem:[%s5 + $0x1f8] sm:$0xff]
  %v316 = vld [vmem:[%s6] sm:$0x1]
  %v318 = vperm.slane %v316, 0
  %320 = vmatpush.msra.mxu0 %v267
  %321 = vmatpush.msra.mxu0 %v266
  %322 = vmatpush.msra.mxu0 %v265
  %323 = vmatpush.msra.mxu0 %v264
  %324 = vmatpush.msra.mxu0 %v263
  %325 = vmatpush.msra.mxu0 %v262
  %326 = vmatpush.msra.mxu0 %v261
  %327 = vmatpush.msra.mxu0 %v260
  %328 = vmatpush.msra.mxu0 %v259
  %329 = vmatpush.msra.mxu0 %v258
  %330 = vmatpush.msra.mxu0 %v257
  %331 = vmatpush.msra.mxu0 %v256
  %332 = vmatpush.msra.mxu0 %v255
  %333 = vmatpush.msra.mxu0 %v254
  %334 = vmatpush.msra.mxu0 %v253
  %335 = vmatpush.msra.mxu0 %v252
  %336 = vmatmul.f32.gmra.mxu0 %v244
  %v337 = vpop.f32.mrf.mxu0
  %v338 = vadd.f32 %v318, %v337
  %339 = vmatmul.f32.gmra.mxu0 %v248
  %v340 = vpop.f32.mrf.mxu0
  %v341 = vadd.f32 %v318, %v340
  %342 = vdwg.mxu0
  %343 = vmatpush.msra.mxu0 %v283
  %344 = vmatpush.msra.mxu0 %v282
  %345 = vmatpush.msra.mxu0 %v281
  %346 = vmatpush.msra.mxu0 %v280
  %347 = vmatpush.msra.mxu0 %v279
  %348 = vmatpush.msra.mxu0 %v278
  %349 = vmatpush.msra.mxu0 %v277
  %350 = vmatpush.msra.mxu0 %v276
  %351 = vmatpush.msra.mxu0 %v275
  %352 = vmatpush.msra.mxu0 %v274
  %353 = vmatpush.msra.mxu0 %v273
  %354 = vmatpush.msra.mxu0 %v272
  %355 = vmatpush.msra.mxu0 %v271
  %356 = vmatpush.msra.mxu0 %v270
  %357 = vmatpush.msra.mxu0 %v269
  %358 = vmatpush.msra.mxu0 %v268
  %359 = vmatmul.f32.gmra.mxu0 %v245
  %v360 = vpop.f32.mrf.mxu0
  %v361 = vadd.f32 %v338, %v360
  %362 = vmatmul.f32.gmra.mxu0 %v249
  %v363 = vpop.f32.mrf.mxu0
  %v364 = vadd.f32 %v341, %v363
  %365 = vdwg.mxu0
  %366 = vmatpush.msra.mxu0 %v299
  %367 = vmatpush.msra.mxu0 %v298
  %368 = vmatpush.msra.mxu0 %v297
  %369 = vmatpush.msra.mxu0 %v296
  %370 = vmatpush.msra.mxu0 %v295
  %371 = vmatpush.msra.mxu0 %v294
  %372 = vmatpush.msra.mxu0 %v293
  %373 = vmatpush.msra.mxu0 %v292
  %374 = vmatpush.msra.mxu0 %v291
  %375 = vmatpush.msra.mxu0 %v290
  %376 = vmatpush.msra.mxu0 %v289
  %377 = vmatpush.msra.mxu0 %v288
  %378 = vmatpush.msra.mxu0 %v287
  %379 = vmatpush.msra.mxu0 %v286
  %380 = vmatpush.msra.mxu0 %v285
  %381 = vmatpush.msra.mxu0 %v284
  %382 = vmatmul.f32.gmra.mxu0 %v246
  %v383 = vpop.f32.mrf.mxu0
  %v384 = vadd.f32 %v361, %v383
  %385 = vmatmul.f32.gmra.mxu0 %v250
  %v386 = vpop.f32.mrf.mxu0
  %v387 = vadd.f32 %v364, %v386
  %388 = vdwg.mxu0
  %389 = vmatpush.msra.mxu0 %v315
  %390 = vmatpush.msra.mxu0 %v314
  %391 = vmatpush.msra.mxu0 %v313
  %392 = vmatpush.msra.mxu0 %v312
  %393 = vmatpush.msra.mxu0 %v311
  %394 = vmatpush.msra.mxu0 %v310
  %395 = vmatpush.msra.mxu0 %v309
  %396 = vmatpush.msra.mxu0 %v308
  %397 = vmatpush.msra.mxu0 %v307
  %398 = vmatpush.msra.mxu0 %v306
  %399 = vmatpush.msra.mxu0 %v305
  %400 = vmatpush.msra.mxu0 %v304
  %401 = vmatpush.msra.mxu0 %v303
  %402 = vmatpush.msra.mxu0 %v302
  %403 = vmatpush.msra.mxu0 %v301
  %404 = vmatpush.msra.mxu0 %v300
  %405 = vmatmul.f32.gmra.mxu0 %v247
  %v406 = vpop.f32.mrf.mxu0
  %v407 = vadd.f32 %v384, %v406
  %408 = vmatmul.f32.gmra.mxu0 %v251
  %v409 = vpop.f32.mrf.mxu0
  %v410 = vadd.f32 %v387, %v409
  %411 = vdwg.mxu0
  %v412 = vmax.f32 %v407, 0.0
  %v413 = vmax.f32 %v410, 0.0
  %v414 = vld [vmem:[%s7] sm:$0xff]
  %v415 = vld [vmem:[%s7 + $0x8] sm:$0xff]
  %v416 = vld [vmem:[%s7 + $0x10] sm:$0xff]
  %v417 = vld [vmem:[%s7 + $0x18] sm:$0xff]
  %v418 = vld [vmem:[%s7 + $0x20] sm:$0xff]
  %v419 = vld [vmem:[%s7 + $0x28] sm:$0xff]
  %v420 = vld [vmem:[%s7 + $0x30] sm:$0xff]
  %v421 = vld [vmem:[%s7 + $0x38] sm:$0xff]
  %v422 = vld [vmem:[%s8] sm:$0x1]
  %v424 = vperm.slane %v422, 0
  %vm426 = vcmask 523264
  %v428 = vsel %vm426, %v412, 0
  %v431 = vsel %vm426, %v413, 0
  %433 = vmatpush.msra.mxu0 0.0
  %434 = vmatpush.msra.mxu0 0.0
  %435 = vmatpush.msra.mxu0 0.0
  %436 = vmatpush.msra.mxu0 0.0
  %437 = vmatpush.msra.mxu0 0.0
  %438 = vmatpush.msra.mxu0 0.0
  %439 = vmatpush.msra.mxu0 0.0
  %440 = vmatpush.msra.mxu0 0.0
  %441 = vmatpush.msra.mxu0 %v421
  %442 = vmatpush.msra.mxu0 %v420
  %443 = vmatpush.msra.mxu0 %v419
  %444 = vmatpush.msra.mxu0 %v418
  %445 = vmatpush.msra.mxu0 %v417
  %446 = vmatpush.msra.mxu0 %v416
  %447 = vmatpush.msra.mxu0 %v415
  %448 = vmatpush.msra.mxu0 %v414
  %449 = vmatmul.f32.gmra.mxu0 %v428
  %v450 = vpop.f32.mrf.mxu0
  %v451 = vadd.f32 %v424, %v450
  %452 = vmatmul.f32.gmra.mxu0 %v431
  %v453 = vpop.f32.mrf.mxu0
  %v454 = vadd.f32 %v424, %v453
  %455 = vdwg.mxu0
  %457 = vrot.lane.b32.xlu0 %v451, 32
  %v458 = vpop.permute.xlu0 %457
  %vm460 = vcmask 1041664
  %461 = vst.msk [vmem:[%s9] sm:$0x3] %vm460, %v458
  %462 = vst.sshfl [vmem:[#allocation1] sm:$0xff pattern:$0x73625140] %v451
  %s463 = scalar_lea.vmem [#allocation1], 1
  %v464 = vld [vmem:[%s463] ss:$4 sm:$0xff]
  %465 = vrot.lane.b32.xlu0 %v464, 32
  %v466 = vpop.permute.xlu0 %465
  %468 = vst.msk [vmem:[%s9 + $0x2] sm:$0x3] %vm460, %v466
  %469 = vst.sshfl [vmem:[#allocation1] sm:$0xff pattern:$0x73625140] %v451
  %s470 = scalar_lea.vmem [#allocation1], 2
  %v471 = vld [vmem:[%s470] ss:$4 sm:$0xff]
  %472 = vrot.lane.b32.xlu0 %v471, 32
  %v473 = vpop.permute.xlu0 %472
  %475 = vst.msk [vmem:[%s9 + $0x4] sm:$0x3] %vm460, %v473
  %476 = vst.sshfl [vmem:[#allocation1] sm:$0xff pattern:$0x73625140] %v451
  %s477 = scalar_lea.vmem [#allocation1], 3
  %v478 = vld [vmem:[%s477] ss:$4 sm:$0xff]
  %479 = vrot.lane.b32.xlu0 %v478, 32
  %v480 = vpop.permute.xlu0 %479
  %482 = vst.msk [vmem:[%s9 + $0x6] sm:$0x3] %vm460, %v480
  %484 = vrot.lane.b32.xlu0 %v454, 32
  %v485 = vpop.permute.xlu0 %484
  %487 = vst.msk [vmem:[%s9 + $0x8] sm:$0x3] %vm460, %v485
  %488 = vst.sshfl [vmem:[#allocation1] sm:$0xff pattern:$0x73625140] %v454
  %s489 = scalar_lea.vmem [#allocation1], 1
  %v490 = vld [vmem:[%s489] ss:$4 sm:$0xff]
  %491 = vrot.lane.b32.xlu0 %v490, 32
  %v492 = vpop.permute.xlu0 %491
  %494 = vst.msk [vmem:[%s9 + $0xa] sm:$0x3] %vm460, %v492
  // Predicated region
  $region38: #{multimodal_decoder.1} parent=0 // pred_check
    _
  $region39: #{multimodal_decoder.1} parent=0 // pred_check_branch
    %496 = sbr.rel (0) target = $region41
  $region40: #{multimodal_decoder.1} parent=0 // pred_region
    _
  $region41: #{multimodal_decoder.1} parent=0 // pred_fallthru
    _
  // Predicated region
  $region42: #{multimodal_decoder.1} parent=0 // pred_check
    _
  $region43: #{multimodal_decoder.1} parent=0 // pred_check_branch
    %498 = sbr.rel (0) target = $region45
  $region44: #{multimodal_decoder.1} parent=0 // pred_region
    _
  $region45: #{multimodal_decoder.1} parent=0 // pred_fallthru
    _

</llo_original>
